<compile_context>
chip_gen: v5e
topology: v5e:2x2
jax: 0.10.0
libtpu: 0.0.40
codegen_flags: <defaults>
</compile_context>

<pallas_src>
import functools
import math

import jax
import jax.numpy as jnp
from jax.experimental import pallas as pl
from jax.experimental.pallas import tpu as pltpu

LANE = 128
SUBLANE = 8


def _round_up(x, m):
    return ((x + m - 1) // m) * m


# ---------------------------------------------------------------------------
# Kernel
# ---------------------------------------------------------------------------

def _time_embedding_kernel(t_ref, freqs_ref, phase_ref, w1_ref, b1_ref, w2_ref, b2_ref,
                           out_ref):
    # t_ref     : (TILE_B, 1) f32 timesteps
    # freqs_ref : (1, Kp) f32 de-interleaved [freqs | freqs | 0-pad]
    # phase_ref : (1, Kp) f32 [0 ... 0 | pi/2 ... pi/2 | 0-pad]
    # w1_ref    : (Kp, Np) rows permuted to de-interleaved order, zero-padded
    # b1_ref/b2_ref : (1, Np) f32,  w2_ref : (Np, Np)
    #
    # Sinusoidal features in ONE transcendental pass: sin(t*f + phase) gives sin for the
    # first half and cos for the second half; pad lanes (freq=0, phase=0) are exactly 0
    # and also hit zero rows of w1.
    ang = t_ref[...] * freqs_ref[...] + phase_ref[...]          # (TILE_B, Kp)  VPU
    x = jnp.sin(ang)                                            # EUP, single pass

    # Linear(d_model, dim) + Swish. MXU operands in the weight dtype (bf16 or f32),
    # accumulation in f32; elementwise math stays f32.
    h = jnp.dot(x.astype(w1_ref.dtype), w1_ref[...],
                preferred_element_type=jnp.float32) + b1_ref[...]
    h = h * jax.nn.sigmoid(h)                                   # Swish (logistic -> EUP)

    # Linear(dim, dim)
    y = jnp.dot(h.astype(w2_ref.dtype), w2_ref[...],
                preferred_element_type=jnp.float32) + b2_ref[...]
    out_ref[...] = y.astype(out_ref.dtype)


# ---------------------------------------------------------------------------
# One-time parameter preparation (hoisted out of the per-call path)
# ---------------------------------------------------------------------------

def init_time_embedding(w1, b1, w2, b2, *, use_bf16=True):
    """Prepare (permute / zero-pad / cast) parameters once. Returns (params_dict, dim)."""
    d_model, dim = w1.shape
    assert d_model % 2 == 0
    half = d_model // 2
    Kp = _round_up(d_model, LANE)
    Np = _round_up(dim, LANE)

    # Sinusoidal frequencies exactly as the PyTorch __init__, laid out de-interleaved,
    # plus the phase vector that turns the second half into cosines.
    freqs = jnp.exp(-(jnp.arange(0, d_model, 2, dtype=jnp.float32)
                      / d_model * math.log(10000.0)))           # (half,)
    freqs_full = (jnp.zeros((1, Kp), jnp.float32)
                  .at[0, :half].set(freqs)
                  .at[0, half:d_model].set(freqs))
    phase_full = jnp.zeros((1, Kp), jnp.float32).at[0, half:d_model].set(jnp.pi / 2.0)

    # Permute w1 rows from interleaved [sin0,cos0,sin1,cos1,...] to [sin...|cos...],
    # then zero-pad every parameter to lane-dense (multiples of 128) shapes.
    perm = jnp.concatenate([jnp.arange(0, d_model, 2), jnp.arange(1, d_model, 2)])
    w_dtype = jnp.bfloat16 if use_bf16 else jnp.float32
    w1_p = jnp.zeros((Kp, Np), w_dtype).at[:d_model, :dim].set(w1[perm].astype(w_dtype))
    w2_p = jnp.zeros((Np, Np), w_dtype).at[:dim, :dim].set(w2.astype(w_dtype))
    b1_p = jnp.zeros((1, Np), jnp.float32).at[0, :dim].set(jnp.reshape(b1, (-1,)))
    b2_p = jnp.zeros((1, Np), jnp.float32).at[0, :dim].set(jnp.reshape(b2, (-1,)))

    params = {"freqs": freqs_full, "phase": phase_full,
              "w1": w1_p, "b1": b1_p, "w2": w2_p, "b2": b2_p}
    return params, dim


def _pick_tile_b(B, max_tile_b=256):
    """Batch tile: as large as max_tile_b, but >= 2 grid steps when B >= 16 (v7x 2-TC)."""
    b_pad_min = _round_up(B, SUBLANE)
    tile_b = min(max_tile_b, b_pad_min)
    if B >= 16:
        tile_b = min(tile_b, _round_up(pl.cdiv(b_pad_min, 2), SUBLANE))
    return tile_b


# ---------------------------------------------------------------------------
# Forward (jitted; only batch pad + pallas_call + slice happen per call)
# ---------------------------------------------------------------------------

@functools.partial(jax.jit, static_argnames=("dim", "tile_b"))
def _time_embedding_forward(t, freqs, phase, w1_p, b1_p, w2_p, b2_p, *, dim, tile_b):
    Kp, Np = w1_p.shape
    B = t.shape[0]
    B_pad = _round_up(B, tile_b)
    t_col = jnp.zeros((B_pad, 1), jnp.float32).at[:B, 0].set(t.astype(jnp.float32))

    grid = (B_pad // tile_b,)
    const_map = lambda i: (0, 0)

    out = pl.pallas_call(
        _time_embedding_kernel,
        out_shape=jax.ShapeDtypeStruct((B_pad, Np), jnp.float32),
        grid_spec=pltpu.PrefetchScalarGridSpec(
            num_scalar_prefetch=0,
            grid=grid,
            in_specs=[
                pl.BlockSpec((tile_b, 1), lambda i: (i, 0)),   # t (per batch tile)
                pl.BlockSpec((1, Kp), const_map),              # freqs (VMEM-resident)
                pl.BlockSpec((1, Kp), const_map),              # phase
                pl.BlockSpec((Kp, Np), const_map),             # w1
                pl.BlockSpec((1, Np), const_map),              # b1
                pl.BlockSpec((Np, Np), const_map),             # w2
                pl.BlockSpec((1, Np), const_map),              # b2
            ],
            out_specs=pl.BlockSpec((tile_b, Np), lambda i: (i, 0)),
        ),
        compiler_params=pltpu.CompilerParams(
            dimension_semantics=("parallel",)),
    )(t_col, freqs, phase, w1_p, b1_p, w2_p, b2_p)

    return out[:B, :dim]


class TimeEmbedding:
    """Cached-parameter wrapper mirroring the PyTorch TimeEmbedding forward."""

    def __init__(self, w1, b1, w2, b2, *, use_bf16=True, max_tile_b=256):
        self.params, self.dim = init_time_embedding(w1, b1, w2, b2, use_bf16=use_bf16)
        self.max_tile_b = max_tile_b

    def __call__(self, t):
        tile_b = _pick_tile_b(int(t.shape[0]), self.max_tile_b)
        p = self.params
        return _time_embedding_forward(
            t, p["freqs"], p["phase"], p["w1"], p["b1"], p["w2"], p["b2"],
            dim=self.dim, tile_b=tile_b)


# ---------------------------------------------------------------------------
# Reference (mirrors the PyTorch module exactly) and test harness.
# ---------------------------------------------------------------------------

def build_sinusoidal_table(T, d_model):
    freqs = jnp.exp(-(jnp.arange(0, d_model, 2, dtype=jnp.float32)
                      / d_model * math.log(10000.0)))
    pos = jnp.arange(T, dtype=jnp.float32)
    angles = pos[:, None] * freqs[None, :]
    table = jnp.stack([jnp.sin(angles), jnp.cos(angles)], axis=-1)  # interleaved
    return table.reshape(T, d_model)


def xavier_uniform(key, fan_in, fan_out):
    bound = math.sqrt(6.0 / (fan_in + fan_out))
    return jax.random.uniform(key, (fan_in, fan_out), jnp.float32, -bound, bound)


def reference_forward(t, table, w1, b1, w2, b2):
    x = table[t.astype(jnp.int32)]
    h = x @ w1 + b1.reshape(1, -1)
    h = h * jax.nn.sigmoid(h)
    return h @ w2 + b2.reshape(1, -1)


if __name__ == "__main__":
    T, d_model, dim = 64, 32, 64

    key = jax.random.PRNGKey(0)
    k_w1, k_w2, k_t1, k_t2 = jax.random.split(key, 4)

    w1 = xavier_uniform(k_w1, d_model, dim)     # (in, out)
    b1 = jnp.zeros((dim,), jnp.float32)
    w2 = xavier_uniform(k_w2, dim, dim)         # (in, out)
    b2 = jnp.zeros((dim,), jnp.float32)
    table = build_sinusoidal_table(T, d_model)

    # 1) Small batch, f32 weights: tight numerical check (single grid step).
    emb_f32 = TimeEmbedding(w1, b1, w2, b2, use_bf16=False)
    B1 = 8
    t1 = jax.random.randint(k_t1, (B1,), 0, T, dtype=jnp.int32)
    out_f32 = jax.block_until_ready(emb_f32(t1))
    ref1 = reference_forward(t1, table, w1, b1, w2, b2)
    assert out_f32.shape == (B1, dim)
    assert jnp.allclose(out_f32, ref1, atol=1e-4, rtol=1e-3), "f32 mismatch vs reference"

    # 2) Larger, non-multiple batch (exercises the >=2-step parallel grid, batch padding
    #    and slicing) with the bf16 MXU fast path: looser tolerance.
    emb_bf16 = TimeEmbedding(w1, b1, w2, b2, use_bf16=True)
    B2 = 300
    t2 = jax.random.randint(k_t2, (B2,), 0, T, dtype=jnp.int32)
    out_bf16 = jax.block_until_ready(emb_bf16(t2))
    ref2 = reference_forward(t2, table, w1, b1, w2, b2)
    assert out_bf16.shape == (B2, dim)
    assert jnp.allclose(out_bf16, ref2, atol=5e-2, rtol=5e-2), "bf16 mismatch vs reference"

    print("KERNEL_OK")
</pallas_src>

<mosaic_0001>
module attributes {stable_mosaic.version = 11 : i64} {
  func.func @_time_embedding_kernel(%arg0: i32, %arg1: memref<8x1xf32, #tpu.memory_space<vmem>>, %arg2: memref<1x128xf32, #tpu.memory_space<vmem>>, %arg3: memref<1x128xf32, #tpu.memory_space<vmem>>, %arg4: memref<128x128xf32, #tpu.memory_space<vmem>>, %arg5: memref<1x128xf32, #tpu.memory_space<vmem>>, %arg6: memref<128x128xf32, #tpu.memory_space<vmem>>, %arg7: memref<1x128xf32, #tpu.memory_space<vmem>>, %arg8: memref<8x128xf32, #tpu.memory_space<vmem>>) attributes {dimension_semantics = [#tpu.dimension_semantics<parallel>], iteration_bounds = array<i64: 1>, scalar_prefetch = 0 : i64, scratch_operands = 0 : i64, tpu.core_type = #tpu.core_type<tc>, window_params = [{transform_indices = @transform_0, window_bounds = array<i64: 8, 1>}, {pipeline_mode = #tpu.pipeline_mode<synchronous>, transform_indices = @transform_1, window_bounds = array<i64: 1, 128>}, {pipeline_mode = #tpu.pipeline_mode<synchronous>, transform_indices = @transform_2, window_bounds = array<i64: 1, 128>}, {pipeline_mode = #tpu.pipeline_mode<synchronous>, transform_indices = @transform_3, window_bounds = array<i64: 128, 128>}, {pipeline_mode = #tpu.pipeline_mode<synchronous>, transform_indices = @transform_4, window_bounds = array<i64: 1, 128>}, {pipeline_mode = #tpu.pipeline_mode<synchronous>, transform_indices = @transform_5, window_bounds = array<i64: 128, 128>}, {pipeline_mode = #tpu.pipeline_mode<synchronous>, transform_indices = @transform_6, window_bounds = array<i64: 1, 128>}, {transform_indices = @transform_7, window_bounds = array<i64: 8, 128>}]} {
    %c0 = arith.constant 0 : index
    %c0_0 = arith.constant 0 : index
    %0 = vector.load %arg1[%c0, %c0_0] : memref<8x1xf32, #tpu.memory_space<vmem>>, vector<8x1xf32>
    %c0_1 = arith.constant 0 : index
    %c0_2 = arith.constant 0 : index
    %1 = vector.load %arg2[%c0_1, %c0_2] : memref<1x128xf32, #tpu.memory_space<vmem>>, vector<1x128xf32>
    %2 = vector.broadcast %0 : vector<8x1xf32> to vector<8x128xf32>
    %3 = vector.broadcast %1 : vector<1x128xf32> to vector<8x128xf32>
    %4 = arith.mulf %2, %3 : vector<8x128xf32>
    %c0_3 = arith.constant 0 : index
    %c0_4 = arith.constant 0 : index
    %5 = vector.load %arg3[%c0_3, %c0_4] : memref<1x128xf32, #tpu.memory_space<vmem>>, vector<1x128xf32>
    %6 = vector.broadcast %5 : vector<1x128xf32> to vector<8x128xf32>
    %7 = arith.addf %4, %6 : vector<8x128xf32>
    %8 = math.sin %7 : vector<8x128xf32>
    %c0_5 = arith.constant 0 : index
    %c0_6 = arith.constant 0 : index
    %9 = vector.load %arg4[%c0_5, %c0_6] : memref<128x128xf32, #tpu.memory_space<vmem>>, vector<128x128xf32>
    %cst = arith.constant dense<0.000000e+00> : vector<8x128xf32>
    %10 = tpu.matmul %8, %9, %cst {dimension_numbers = #tpu.dot_dimension_numbers<[1], [0], [0], [1], [0, 0, 1, 1], [], []>} : vector<8x128xf32>, vector<128x128xf32>, vector<8x128xf32> -> vector<8x128xf32>
    %c0_7 = arith.constant 0 : index
    %c0_8 = arith.constant 0 : index
    %11 = vector.load %arg5[%c0_7, %c0_8] : memref<1x128xf32, #tpu.memory_space<vmem>>, vector<1x128xf32>
    %12 = vector.broadcast %11 : vector<1x128xf32> to vector<8x128xf32>
    %13 = arith.addf %10, %12 : vector<8x128xf32>
    %14 = arith.negf %13 : vector<8x128xf32>
    %15 = math.exp %14 : vector<8x128xf32>
    %cst_9 = arith.constant 1.000000e+00 : f32
    %16 = vector.broadcast %cst_9 : f32 to vector<8x128xf32>
    %17 = arith.addf %16, %15 : vector<8x128xf32>
    %18 = arith.divf %16, %17 : vector<8x128xf32>
    %19 = arith.mulf %13, %18 : vector<8x128xf32>
    %c0_10 = arith.constant 0 : index
    %c0_11 = arith.constant 0 : index
    %20 = vector.load %arg6[%c0_10, %c0_11] : memref<128x128xf32, #tpu.memory_space<vmem>>, vector<128x128xf32>
    %cst_12 = arith.constant dense<0.000000e+00> : vector<8x128xf32>
    %21 = tpu.matmul %19, %20, %cst_12 {dimension_numbers = #tpu.dot_dimension_numbers<[1], [0], [0], [1], [0, 0, 1, 1], [], []>} : vector<8x128xf32>, vector<128x128xf32>, vector<8x128xf32> -> vector<8x128xf32>
    %c0_13 = arith.constant 0 : index
    %c0_14 = arith.constant 0 : index
    %22 = vector.load %arg7[%c0_13, %c0_14] : memref<1x128xf32, #tpu.memory_space<vmem>>, vector<1x128xf32>
    %23 = vector.broadcast %22 : vector<1x128xf32> to vector<8x128xf32>
    %24 = arith.addf %21, %23 : vector<8x128xf32>
    %c0_15 = arith.constant 0 : index
    %c0_16 = arith.constant 0 : index
    %25 = vector.load %arg8[%c0_15, %c0_16] : memref<8x128xf32, #tpu.memory_space<vmem>>, vector<8x128xf32>
    tpu.vector_store %arg8[%c0_15, %c0_16], %24 {strides = array<i32>} : memref<8x128xf32, #tpu.memory_space<vmem>>, vector<8x128xf32>,
    return
  }
  func.func @transform_0(%arg0: i32) -> (i32, i32) {
    %c0_i32 = arith.constant 0 : i32
    %c0_i32_0 = arith.constant 0 : i32
    return %arg0, %c0_i32 : i32, i32
  }
  func.func @transform_1(%arg0: i32) -> (i32, i32) {
    %c0_i32 = arith.constant 0 : i32
    %c0_i32_0 = arith.constant 0 : i32
    %c0_i32_1 = arith.constant 0 : i32
    return %c0_i32, %c0_i32_0 : i32, i32
  }
  func.func @transform_2(%arg0: i32) -> (i32, i32) {
    %c0_i32 = arith.constant 0 : i32
    %c0_i32_0 = arith.constant 0 : i32
    %c0_i32_1 = arith.constant 0 : i32
    return %c0_i32, %c0_i32_0 : i32, i32
  }
  func.func @transform_3(%arg0: i32) -> (i32, i32) {
    %c0_i32 = arith.constant 0 : i32
    %c0_i32_0 = arith.constant 0 : i32
    %c0_i32_1 = arith.constant 0 : i32
    return %c0_i32, %c0_i32_0 : i32, i32
  }
  func.func @transform_4(%arg0: i32) -> (i32, i32) {
    %c0_i32 = arith.constant 0 : i32
    %c0_i32_0 = arith.constant 0 : i32
    %c0_i32_1 = arith.constant 0 : i32
    return %c0_i32, %c0_i32_0 : i32, i32
  }
  func.func @transform_5(%arg0: i32) -> (i32, i32) {
    %c0_i32 = arith.constant 0 : i32
    %c0_i32_0 = arith.constant 0 : i32
    %c0_i32_1 = arith.constant 0 : i32
    return %c0_i32, %c0_i32_0 : i32, i32
  }
  func.func @transform_6(%arg0: i32) -> (i32, i32) {
    %c0_i32 = arith.constant 0 : i32
    %c0_i32_0 = arith.constant 0 : i32
    %c0_i32_1 = arith.constant 0 : i32
    return %c0_i32, %c0_i32_0 : i32, i32
  }
  func.func @transform_7(%arg0: i32) -> (i32, i32) {
    %c0_i32 = arith.constant 0 : i32
    %c0_i32_0 = arith.constant 0 : i32
    return %arg0, %c0_i32 : i32, i32
  }
}

</mosaic_0001>

<llo_original>
// kernel: _time_embedding_forward.1
$region0: #{_time_embedding_forward.1}
  #allocation0 [shape = 'u32[]', space=smem, size = 0x4, offset = 0x4, fixed_abs, tag = 'smem constant byte address 0x4 - core index']
  #allocation1 [shape = 'u32[72,128]{1,0:T(1,128)}', space=vmem, size = 0x9000, scoped, tag = 'internal scratch']
  %s0 = inlined_call_operand.vmem [shape: f32[8,1], index: 0, kind: input, shape index: {}]
  %s1 = inlined_call_operand.vmem [shape: f32[1,128], index: 1, kind: input, shape index: {}]
  %s2 = inlined_call_operand.vmem [shape: f32[1,128], index: 2, kind: input, shape index: {}]
  %s3 = inlined_call_operand.hbm [shape: f32[128,128], index: 3, kind: input, shape index: {}]
  %s4 = inlined_call_operand.vmem [shape: f32[1,128], index: 4, kind: input, shape index: {}]
  %s5 = inlined_call_operand.hbm [shape: f32[128,128], index: 5, kind: input, shape index: {}]
  %s6 = inlined_call_operand.vmem [shape: f32[1,128], index: 6, kind: input, shape index: {}]
  %s7 = inlined_call_operand.hbm [shape: f32[8,128], index: 7, kind: output, shape index: {}]
  %s8 = sld [smem:[#allocation0]]
  $region46: #{_time_embedding_forward.1} parent=0
    _
  %s10 = ssub.s32 1, %s8
  %s11 = scalar_select 0, %s10, %s8
  $region1: #{_time_embedding_forward.1} parent=0
    #allocation2 [shape = 'u8[65536]{0}', space=vmem, size = 0x10000, scoped, tag = 'input window, operand 3, single buffered']
    #allocation3 [shape = 's32[1]{0}', space=sflag, size = 0x4, scoped, tag = 'scoped memory for _time_embedding_forward.1']
    #allocation4 [shape = 's32[1]{0}', space=sflag, size = 0x4, scoped, tag = 'scoped memory for _time_embedding_forward.1']
    #allocation5 [shape = 'u8[65536]{0}', space=vmem, size = 0x10000, scoped, tag = 'input window, operand 5, single buffered']
    #allocation6 [shape = 's32[1]{0}', space=sflag, size = 0x4, scoped, tag = 'scoped memory for _time_embedding_forward.1']
    #allocation7 [shape = 'u8[4096]{0}', space=vmem, size = 0x1000, scoped, tag = 'output window, operand 0, single buffered']
    %12 = vsyncpa [#allocation3], 0
    %13 = vsyncpa [#allocation6], 0
    %14 = vsyncpa [#allocation4], 0
    // Predicated region
    $region2: #{_time_embedding_forward.1} parent=1 // pred_check
      _
    $region3: #{_time_embedding_forward.1} parent=1 // pred_check_branch
      %16 = sbr.rel (0) target = $region5
    $region4: #{_time_embedding_forward.1} parent=1 // pred_region
      _
    $region5: #{_time_embedding_forward.1} parent=1 // pred_fallthru
      _
    // Predicated region
    $region6: #{_time_embedding_forward.1} parent=1 // pred_check
      _
    $region7: #{_time_embedding_forward.1} parent=1 // pred_check_branch
      %18 = sbr.rel (0) target = $region9
    $region8: #{_time_embedding_forward.1} parent=1 // pred_region
      _
    $region9: #{_time_embedding_forward.1} parent=1 // pred_fallthru
      _
    // Predicated region
    $region10: #{_time_embedding_forward.1} parent=1 // pred_check
      _
    $region11: #{_time_embedding_forward.1} parent=1 // pred_check_branch
      %20 = sbr.rel (0) target = $region13
    $region12: #{_time_embedding_forward.1} parent=1 // pred_region
      _
    $region13: #{_time_embedding_forward.1} parent=1 // pred_fallthru
      _
    // Predicated region
    $region14: #{_time_embedding_forward.1} parent=1 // pred_check
      _
    $region15: #{_time_embedding_forward.1} parent=1 // pred_check_branch
      %22 = sbr.rel (0) target = $region17
    $region16: #{_time_embedding_forward.1} parent=1 // pred_region
      %24 = vsyncadd [#allocation3], 0
      %s25 = sshll.u32 %s3, 4
      %s26 = int_to_ptr.hbm [resolvable:$true] %s25
      %s27 = sshll.u32 [#allocation2], 4
      %s28 = int_to_ptr.vmem [resolvable:$true] %s27
      %33 = dma.hbm_to_vmem [thread:$0]  %s26, 2048, %s28, [#allocation3], 128, 128, 8
    $region17: #{_time_embedding_forward.1} parent=1 // pred_fallthru
      _
    // Predicated region
    $region18: #{_time_embedding_forward.1} parent=1 // pred_check
      _
    $region19: #{_time_embedding_forward.1} parent=1 // pred_check_branch
      %35 = sbr.rel (0) target = $region21
    $region20: #{_time_embedding_forward.1} parent=1 // pred_region
      _
    $region21: #{_time_embedding_forward.1} parent=1 // pred_fallthru
      _
    // Predicated region
    $region22: #{_time_embedding_forward.1} parent=1 // pred_check
      _
    $region23: #{_time_embedding_forward.1} parent=1 // pred_check_branch
      %37 = sbr.rel (0) target = $region25
    $region24: #{_time_embedding_forward.1} parent=1 // pred_region
      %39 = vsyncadd [#allocation6], 0
      %s40 = sshll.u32 %s5, 4
      %s41 = int_to_ptr.hbm [resolvable:$true] %s40
      %s42 = sshll.u32 [#allocation5], 4
      %s43 = int_to_ptr.vmem [resolvable:$true] %s42
      %48 = dma.hbm_to_vmem [thread:$0]  %s41, 2048, %s43, [#allocation6], 128, 128, 8
    $region25: #{_time_embedding_forward.1} parent=1 // pred_fallthru
      _
    // Predicated region
    $region26: #{_time_embedding_forward.1} parent=1 // pred_check
      _
    $region27: #{_time_embedding_forward.1} parent=1 // pred_check_branch
      %50 = sbr.rel (0) target = $region29
    $region28: #{_time_embedding_forward.1} parent=1 // pred_region
      _
    $region29: #{_time_embedding_forward.1} parent=1 // pred_fallthru
      _
    // Predicated region
    $region30: #{_time_embedding_forward.1} parent=1 // pred_check
      _
    $region31: #{_time_embedding_forward.1} parent=1 // pred_check_branch
      %52 = sbr.rel (0) target = $region33
    $region32: #{_time_embedding_forward.1} parent=1 // pred_region
      %54 = dma.done [#allocation3], 2048
    $region33: #{_time_embedding_forward.1} parent=1 // pred_fallthru
      _
    // Predicated region
    $region34: #{_time_embedding_forward.1} parent=1 // pred_check
      _
    $region35: #{_time_embedding_forward.1} parent=1 // pred_check_branch
      %56 = sbr.rel (0) target = $region37
    $region36: #{_time_embedding_forward.1} parent=1 // pred_region
      %58 = dma.done [#allocation6], 2048
    $region37: #{_time_embedding_forward.1} parent=1 // pred_fallthru
      _
    %v59 = vld [vmem:[%s0] sm:$0xff]
    %v60 = vld [vmem:[%s1] sm:$0x1]
    %62 = vset.pattern.permute.xlu0 0
    %63 = vperm.xlu0 %62, %v59
    %v64 = vpop.permute.xlu0 %63
    %v67 = vperm.slane %v60, 0
    %v69 = vmul.f32 %v64, %v67
    %v70 = vld [vmem:[%s2] sm:$0x1]
    %v72 = vperm.slane %v70, 0
    %v74 = vadd.f32 %v69, %v72
    %v75 = vand.u32 2147483647, %v74
    %vm76 = vcmp.le.f32.partialorder %v75, 0.7853982
    %vm77 = vcmp.lt.s32.totalorder %v74, 0
    %v78 = vand.u32 %v74, 2139095040
    %v79 = vshrl.u32 %v78, 23
    %v80 = vsub.s32 %v79, 127
    %v81 = vand.u32 2147483647, %v74
    %v82 = vand.u32 %v81, 8388607
    %v83 = vor.u32 %v82, 8388608
    %v84 = vsub.s32 0, %v83
    %v85 = vadd.s32 %v80, 1
    %vm86 = vcmp.gt.s32.totalorder %v85, 0
    %v87 = vsel %vm86, %v85, 0
    %v88 = vshrl.u32 %v87, 5
    %v89 = vand.u32 %v87, 31
    %v90 = vsub.s32 32, %v89
    %v91 = vshrl.u32 683565275, %v90
    %v92 = vshll.u32 683565275, %v89
    %v93 = vshrl.u32 2475754826, %v90
    %v94 = vor.u32 %v92, %v93
    %v95 = vshll.u32 2475754826, %v89
    %v96 = vshrl.u32 2131351028, %v90
    %v97 = vor.u32 %v95, %v96
    %v98 = vshll.u32 2131351028, %v89
    %v99 = vshrl.u32 2102212464, %v90
    %v100 = vor.u32 %v98, %v99
    %v101 = vshll.u32 2102212464, %v89
    %v102 = vshrl.u32 920167782, %v90
    %v103 = vor.u32 %v101, %v102
    %v104 = vshll.u32 920167782, %v89
    %v105 = vshrl.u32 1326507024, %v90
    %v106 = vor.u32 %v104, %v105
    %vm107 = vcmp.lt.s32.totalorder %v88, 1
    %vm108 = vcmp.lt.s32.totalorder %v88, 2
    %vm109 = vcmp.lt.s32.totalorder %v88, 3
    %vm110 = vcmp.lt.s32.totalorder %v88, 4
    %v111 = vsel %vm107, %v91, %v94
    %v112 = vsel %vm110, %v100, 2102212464
    %v113 = vsel %vm109, %v97, %v112
    %v114 = vsel %vm108, %v111, %v113
    %v115 = vsel %vm107, %v94, %v97
    %v116 = vsel %vm110, %v103, 920167782
    %v117 = vsel %vm109, %v100, %v116
    %v118 = vsel %vm108, %v115, %v117
    %v119 = vsel %vm107, %v97, %v100
    %v120 = vsel %vm110, %v106, 1326507024
    %v121 = vsel %vm109, %v103, %v120
    %v122 = vsel %vm108, %v119, %v121
    %v123 = vshll.u32 %v83, 8
    %v124 = vand.u32 %v123, 65535
    %v125 = vshrl.u32 %v123, 16
    %v126 = vand.u32 %v122, 65535
    %v127 = vshrl.u32 %v122, 16
    %v128 = vmul.u32 %v124, %v126
    %v129 = vmul.u32 %v124, %v127
    %v130 = vmul.u32 %v125, %v126
    %v131 = vmul.u32 %v125, %v127
    %v132 = vshll.u32 %v129, 16
    %v133 = vshrl.u32 %v129, 16
    %v134 = vshll.u32 %v130, 16
    %v135 = vshrl.u32 %v130, 16
    %vm136 = vc.u32 %v128, %v132
    %v137 = vsel %vm136, 1, 0
    %v138 = vadd.s32 %v128, %v132
    %v139 = vadd.s32 %v131, %v137
    %vm140 = vc.u32 %v138, %v134
    %v141 = vsel %vm140, 1, 0
    %v142 = vadd.s32 %v138, %v134
    %v143 = vadd.s32 %v139, %v141
    %v144 = vadd.s32 %v143, %v133
    %v145 = vadd.s32 %v144, %v135
    %v146 = vand.u32 %v123, 65535
    %v147 = vshrl.u32 %v123, 16
    %v148 = vand.u32 %v118, 65535
    %v149 = vshrl.u32 %v118, 16
    %v150 = vmul.u32 %v146, %v148
    %v151 = vmul.u32 %v146, %v149
    %v152 = vmul.u32 %v147, %v148
    %v153 = vmul.u32 %v147, %v149
    %v154 = vshll.u32 %v151, 16
    %v155 = vshrl.u32 %v151, 16
    %v156 = vshll.u32 %v152, 16
    %v157 = vshrl.u32 %v152, 16
    %vm158 = vc.u32 %v150, %v154
    %v159 = vsel %vm158, 1, 0
    %v160 = vadd.s32 %v150, %v154
    %v161 = vadd.s32 %v153, %v159
    %vm162 = vc.u32 %v160, %v156
    %v163 = vsel %vm162, 1, 0
    %v164 = vadd.s32 %v160, %v156
    %v165 = vadd.s32 %v161, %v163
    %v166 = vadd.s32 %v165, %v155
    %v167 = vadd.s32 %v166, %v157
    %v168 = vmul.u32 %v123, %v114
    %v169 = vadd.s32 %v145, %v164
    %vm170 = vc.u32 %v145, %v164
    %v171 = vadd.s32 %v167, 1
    %v172 = vsel %vm170, %v171, %v167
    %v173 = vadd.s32 %v168, %v172
    %v174 = vadd.s32 %v173, 536870912
    %v175 = vshrl.u32 %v174, 30
    %v176 = vshll.u32 %v175, 30
    %v177 = vsub.s32 %v173, %v176
    %vm178 = vcmp.lt.s32.totalorder %v177, 0
    %v179 = vsub.s32 0, %v177
    %v180 = vsel %vm178, %v179, %v177
    %v181 = vclz %v180
    %v182 = vsub.s32 %v181, 2
    %vm183 = vcmp.gt.s32.totalorder 0, %v182
    %v184 = vsel %vm183, 0, %v182
    %v185 = vsub.s32 32, %v184
    %v186 = vshll.u32 %v177, %v184
    %v187 = vshrl.u32 %v169, %v185
    %v188 = vor.u32 %v186, %v187
    %v189 = vsub.s32 4294967266, %v184
    %v190 = vadd.s32 %v189, 127
    %v191 = vshll.u32 %v190, 23
    %v192 = vor.u32 4788187, %v191
    %v193 = vand.u32 2147483647, %v192
    %v195 = vcvt.s32.f32 %v188
    %v196 = vmul.f32 %v195, %v193
    %v197 = vxor.u32 %v196, 2147483648
    %v198 = vsel %vm77, %v197, %v196
    %v199 = vsub.s32 4, %v175
    %v200 = vsel %vm77, %v199, %v175
    %v201 = vsel %vm76, %v74, %v198
    %v202 = vsel %vm76, 0, %v200
    %v203 = vmul.f32 %v201, %v201
    %v204 = vmul.f32 %v203, -0.001358992
    %v205 = vadd.f32 %v204, 0.041655596
    %v206 = vmul.f32 %v203, %v205
    %v207 = vadd.f32 %v206, -0.4999988
    %v208 = vmul.f32 %v203, %v207
    %v209 = vadd.f32 1.0, %v208
    %v210 = vmul.f32 %v201, %v201
    %v211 = vmul.f32 %v210, -0.00019511016
    %v212 = vadd.f32 %v211, 0.008332121
    %v213 = vmul.f32 %v210, %v212
    %v214 = vadd.f32 %v213, -0.16666654
    %v215 = vmul.f32 %v210, %v214
    %v216 = vadd.f32 %v215, 1.0
    %v217 = vmul.f32 %v216, %v201
    %vm218 = vweird.f32 %v74
    %v219 = vadd.s32 %v202, 3
    %v220 = vand.u32 %v219, 3
    %vm221 = vcmp.lt.s32.totalorder %v220, 2
    %vm222 = vcmp.eq.s32.totalorder %v220, 0
    %v223 = vxor.u32 %v217, 2147483648
    %v224 = vsel %vm222, %v209, %v223
    %vm225 = vcmp.eq.s32.totalorder %v220, 2
    %v226 = vxor.u32 %v209, 2147483648
    %v227 = vsel %vm225, %v226, %v217
    %v228 = vsel %vm221, %v224, %v227
    %v229 = vsel %vm218, nan, %v228
    %v230 = vld [vmem:[#allocation2] sm:$0xff]
    %v231 = vld [vmem:[#allocation2 + $0x8] sm:$0xff]
    %v232 = vld [vmem:[#allocation2 + $0x10] sm:$0xff]
    %v233 = vld [vmem:[#allocation2 + $0x18] sm:$0xff]
    %v234 = vld [vmem:[#allocation2 + $0x20] sm:$0xff]
    %v235 = vld [vmem:[#allocation2 + $0x28] sm:$0xff]
    %v236 = vld [vmem:[#allocation2 + $0x30] sm:$0xff]
    %v237 = vld [vmem:[#allocation2 + $0x38] sm:$0xff]
    %v238 = vld [vmem:[#allocation2 + $0x40] sm:$0xff]
    %v239 = vld [vmem:[#allocation2 + $0x48] sm:$0xff]
    %v240 = vld [vmem:[#allocation2 + $0x50] sm:$0xff]
    %v241 = vld [vmem:[#allocation2 + $0x58] sm:$0xff]
    %v242 = vld [vmem:[#allocation2 + $0x60] sm:$0xff]
    %v243 = vld [vmem:[#allocation2 + $0x68] sm:$0xff]
    %v244 = vld [vmem:[#allocation2 + $0x70] sm:$0xff]
    %v245 = vld [vmem:[#allocation2 + $0x78] sm:$0xff]
    %v246 = vld [vmem:[%s4] sm:$0x1]
    %v248 = vperm.slane %v246, 0
    %250 = vmatpush.msra.mxu0 %v245
    %251 = vmatpush.msra.mxu0 %v244
    %252 = vmatpush.msra.mxu0 %v243
    %253 = vmatpush.msra.mxu0 %v242
    %254 = vmatpush.msra.mxu0 %v241
    %255 = vmatpush.msra.mxu0 %v240
    %256 = vmatpush.msra.mxu0 %v239
    %257 = vmatpush.msra.mxu0 %v238
    %258 = vmatpush.msra.mxu0 %v237
    %259 = vmatpush.msra.mxu0 %v236
    %260 = vmatpush.msra.mxu0 %v235
    %261 = vmatpush.msra.mxu0 %v234
    %262 = vmatpush.msra.mxu0 %v233
    %263 = vmatpush.msra.mxu0 %v232
    %264 = vmatpush.msra.mxu0 %v231
    %265 = vmatpush.msra.mxu0 %v230
    %266 = vmatmul.f32.gmra.mxu0 %v229
    %v267 = vpop.f32.mrf.mxu0
    %v268 = vadd.f32 %v248, %v267
    %269 = vdwg.mxu0
    %v270 = vxor.u32 %v268, 2147483648
    %v271 = vmul.f32 %v270, 1.442695
    %v272 = vpow.pop %v271
    %v273 = vadd.f32 %v272, 1.0
    %v274 = vrcp.pop %v273
    %v275 = vmul.f32 %v273, %v274
    %v276 = vsub.f32 1.0, %v275
    %v277 = vmul.f32 %v274, %v276
    %v278 = vadd.f32 %v274, %v277
    %vm279 = vweird.f32 %v273
    %vm280 = vweird.f32 %v274
    %vm281 = vmor %vm279, %vm280
    %v282 = vsel %vm281, %v274, %v278
    %v283 = vand.u32 2147483647, %v273
    %vm284 = vcmp.eq.f32.partialorder %v283, 8.507059e+37
    %v285 = vand.u32 %v273, 2147483648
    %v286 = vor.u32 1.1754944e-38, %v285
    %v287 = vsel %vm284, %v286, %v282
    %v288 = vmul.f32 1.0, %v287
    %v289 = vmul.f32 %v268, %v288
    %v290 = vld [vmem:[#allocation5] sm:$0xff]
    %v291 = vld [vmem:[#allocation5 + $0x8] sm:$0xff]
    %v292 = vld [vmem:[#allocation5 + $0x10] sm:$0xff]
    %v293 = vld [vmem:[#allocation5 + $0x18] sm:$0xff]
    %v294 = vld [vmem:[#allocation5 + $0x20] sm:$0xff]
    %v295 = vld [vmem:[#allocation5 + $0x28] sm:$0xff]
    %v296 = vld [vmem:[#allocation5 + $0x30] sm:$0xff]
    %v297 = vld [vmem:[#allocation5 + $0x38] sm:$0xff]
    %v298 = vld [vmem:[#allocation5 + $0x40] sm:$0xff]
    %v299 = vld [vmem:[#allocation5 + $0x48] sm:$0xff]
    %v300 = vld [vmem:[#allocation5 + $0x50] sm:$0xff]
    %v301 = vld [vmem:[#allocation5 + $0x58] sm:$0xff]
    %v302 = vld [vmem:[#allocation5 + $0x60] sm:$0xff]
    %v303 = vld [vmem:[#allocation5 + $0x68] sm:$0xff]
    %v304 = vld [vmem:[#allocation5 + $0x70] sm:$0xff]
    %v305 = vld [vmem:[#allocation5 + $0x78] sm:$0xff]
    %v306 = vld [vmem:[%s6] sm:$0x1]
    %v308 = vperm.slane %v306, 0
    %310 = vmatpush.msra.mxu0 %v305
    %311 = vmatpush.msra.mxu0 %v304
    %312 = vmatpush.msra.mxu0 %v303
    %313 = vmatpush.msra.mxu0 %v302
    %314 = vmatpush.msra.mxu0 %v301
    %315 = vmatpush.msra.mxu0 %v300
    %316 = vmatpush.msra.mxu0 %v299
    %317 = vmatpush.msra.mxu0 %v298
    %318 = vmatpush.msra.mxu0 %v297
    %319 = vmatpush.msra.mxu0 %v296
    %320 = vmatpush.msra.mxu0 %v295
    %321 = vmatpush.msra.mxu0 %v294
    %322 = vmatpush.msra.mxu0 %v293
    %323 = vmatpush.msra.mxu0 %v292
    %324 = vmatpush.msra.mxu0 %v291
    %325 = vmatpush.msra.mxu0 %v290
    %326 = vmatmul.f32.gmra.mxu0 %v289
    %v327 = vpop.f32.mrf.mxu0
    %v328 = vadd.f32 %v308, %v327
    %329 = vdwg.mxu0
    %330 = vst [vmem:[#allocation7] sm:$0xff] %v328
    // Predicated region
    $region38: #{_time_embedding_forward.1} parent=1 // pred_check
      _
    $region39: #{_time_embedding_forward.1} parent=1 // pred_check_branch
      %332 = sbr.rel (0) target = $region41
    $region40: #{_time_embedding_forward.1} parent=1 // pred_region
      %334 = vsyncadd [#allocation4], 0
      %s336 = sshll.u32 [#allocation7], 4
      %s337 = int_to_ptr.vmem [resolvable:$true] %s336
      %s338 = sshll.u32 %s7, 4
      %s339 = int_to_ptr.hbm [resolvable:$true] %s338
      %341 = dma.vmem_to_hbm [thread:$0]  %s337, 128, %s339, [#allocation4]
    $region41: #{_time_embedding_forward.1} parent=1 // pred_fallthru
      _
    // Predicated region
    $region42: #{_time_embedding_forward.1} parent=1 // pred_check
      _
    $region43: #{_time_embedding_forward.1} parent=1 // pred_check_branch
      %343 = sbr.rel (0) target = $region45
    $region44: #{_time_embedding_forward.1} parent=1 // pred_region
      %345 = dma.done [#allocation4], 128
    $region45: #{_time_embedding_forward.1} parent=1 // pred_fallthru
      _
    %346 = vsyncpa [#allocation3], 1
    %347 = vsyncpa [#allocation6], 1
    %348 = vsyncpa [#allocation4], 1

</llo_original>
